<compile_context>
chip_gen: v5e
topology: v5e:2x2
jax: 0.10.0
libtpu: 0.0.40
codegen_flags: <defaults>
</compile_context>

<pallas_src>
import functools

import jax
import jax.numpy as jnp
from jax.experimental import pallas as pl
from jax.experimental.pallas import tpu as pltpu

EPS = 1e-5


def _round_up(n, m):
    return (n + m - 1) // m * m


def _pad2(a, rows, cols, dtype=None):
    if dtype is not None:
        a = a.astype(dtype)
    return jnp.pad(a, ((0, rows - a.shape[0]), (0, cols - a.shape[1])))


# --------------------------------------------------------------------------- #
# Capability probes / budgets
# --------------------------------------------------------------------------- #

def _probe_copy_kernel(x_ref, o_ref):
    o_ref[...] = x_ref[...]


@functools.lru_cache(maxsize=None)
def _pinned_pipeline_mode():
    """pl.Buffered(1) single-buffers operands whose index_map is constant
    (weights, biases, BN scale/shift), halving their resident VMEM.  Probe once
    and fall back to default double-buffering if this build rejects it."""
    try:
        mode = pl.Buffered(1)
        fn = pl.pallas_call(
            _probe_copy_kernel,
            out_shape=jax.ShapeDtypeStruct((8, 128), jnp.float32),
            grid=(2,),
            in_specs=[pl.BlockSpec((8, 128), lambda i: (0, 0),
                                   pipeline_mode=mode)],
            out_specs=pl.BlockSpec((8, 128), lambda i: (0, 0)),
        )
        jax.block_until_ready(fn(jnp.zeros((8, 128), jnp.float32)))
        return mode
    except Exception:  # depends on jax / libtpu version
        return None


def _pinned_spec(shape):
    """BlockSpec for an operand that is identical for every grid step."""
    index_map = lambda i: (0,) * len(shape)
    mode = _pinned_pipeline_mode()
    if mode is None:
        return pl.BlockSpec(shape, index_map)
    return pl.BlockSpec(shape, index_map, pipeline_mode=mode)


@functools.lru_cache(maxsize=None)
def _vmem_limit_bytes():
    """Raise the scoped-VMEM budget (defaults: 16 MiB v5e / 32 MiB v6e,v7x)
    toward physical capacity (128 / 128 / 64 MiB), leaving ~25% headroom."""
    try:
        cap = int(pltpu.get_tpu_info().vmem_capacity_bytes)
    except Exception:
        cap = 64 * 1024 * 1024
    return (cap * 3) // 4


# --------------------------------------------------------------------------- #
# Kernels
# --------------------------------------------------------------------------- #

def _gemm1_stats_kernel(x_ref, w1_ref, h_ref, sum_ref, sq_ref):
    """h = x @ W1 for this batch tile (stored bf16) + per-tile BN partial sums."""
    h = jnp.dot(x_ref[...], w1_ref[...], preferred_element_type=jnp.float32)
    hb = h.astype(jnp.bfloat16)
    h_ref[...] = hb
    # Statistics are taken on the same bf16-rounded activations pass 2 normalizes.
    h32 = hb.astype(jnp.float32)
    sum_ref[...] = jnp.sum(h32, axis=0, keepdims=True)[None]
    sq_ref[...] = jnp.sum(h32 * h32, axis=0, keepdims=True)[None]


def _bn_relu_gemm2_kernel(h_ref, scale_ref, shift_ref, w2_ref, b2_ref, o_ref):
    """Folded BN (one FMA per element) -> ReLU -> a @ W2 + b2 for this tile."""
    h = h_ref[...].astype(jnp.float32)
    a = jnp.maximum(h * scale_ref[...] + shift_ref[...], 0.0).astype(jnp.bfloat16)
    out = jnp.dot(a, w2_ref[...], preferred_element_type=jnp.float32) + b2_ref[...]
    o_ref[...] = out.astype(o_ref.dtype)


# --------------------------------------------------------------------------- #
# Wrapper
# --------------------------------------------------------------------------- #

def prepare_params(w1, b1, gamma, beta, w2, b2):
    """One-time pad (lane-dense multiples of 128) + bf16 cast of the weights.

    Hoisted out of the forward so the per-call wrapper does no weight traffic.
    b1 is dropped: training-mode BatchNorm subtracts the batch mean of
    (x @ W1 + b1), which cancels the bias exactly; dropping it also keeps
    zero-padded batch rows contributing exactly 0 to the BN statistics.
    """
    dim, hidden = w1.shape
    proj = w2.shape[1]
    del b1
    dimp = _round_up(dim, 128)
    hidp = _round_up(hidden, 128)
    projp = _round_up(proj, 128)
    return {
        "w1": _pad2(w1, dimp, hidp, jnp.bfloat16),
        "w2": _pad2(w2, hidp, projp, jnp.bfloat16),
        "gamma": _pad2(gamma, 1, hidp, jnp.float32),
        "beta": _pad2(beta, 1, hidp, jnp.float32),
        "b2": _pad2(b2, 1, projp, jnp.float32),
        "proj": proj,
    }


def mlp_forward(x, params, *, tb_max=256):
    """MLP forward: Linear -> BatchNorm1d(train stats) -> ReLU -> Linear.

    x: [B, dim] float32/bfloat16.  params: output of prepare_params().
    tb_max: batch-tile upper bound (512 is a good choice on v6e/v7x when the
    resident weights are modest; 256 is safe everywhere).
    """
    w1p, w2p = params["w1"], params["w2"]
    gammap, betap, b2p = params["gamma"], params["beta"], params["b2"]
    proj = params["proj"]
    dimp, hidp = w1p.shape
    projp = w2p.shape[1]

    batch = x.shape[0]
    tb = min(tb_max, _round_up(batch, 16))
    batchp = _round_up(batch, tb)
    nt = batchp // tb

    # Only x is padded / cast per call (weights were prepared once).
    xp = x.astype(jnp.bfloat16)
    if xp.shape != (batchp, dimp):
        xp = _pad2(xp, batchp, dimp)

    vmem_limit = _vmem_limit_bytes()

    # ---- Pass 1: GEMM-1 (bf16 h) + per-tile BN partial sums ----------------- #
    h16, psum, psq = pl.pallas_call(
        _gemm1_stats_kernel,
        out_shape=(jax.ShapeDtypeStruct((batchp, hidp), jnp.bfloat16),
                   jax.ShapeDtypeStruct((nt, 1, hidp), jnp.float32),
                   jax.ShapeDtypeStruct((nt, 1, hidp), jnp.float32)),
        grid_spec=pltpu.PrefetchScalarGridSpec(
            num_scalar_prefetch=0,
            grid=(nt,),
            in_specs=[pl.BlockSpec((tb, dimp), lambda i: (i, 0)),
                      _pinned_spec((dimp, hidp))],
            out_specs=[pl.BlockSpec((tb, hidp), lambda i: (i, 0)),
                       pl.BlockSpec((1, 1, hidp), lambda i: (i, 0, 0)),
                       pl.BlockSpec((1, 1, hidp), lambda i: (i, 0, 0))]),
        compiler_params=pltpu.CompilerParams(
            dimension_semantics=("parallel",),
            vmem_limit_bytes=vmem_limit),
        cost_estimate=pl.CostEstimate(
            flops=2 * batchp * dimp * hidp,
            transcendentals=0,
            bytes_accessed=(batchp * dimp + dimp * hidp + batchp * hidp) * 2
                           + 2 * nt * hidp * 4),
    )(xp, w1p)

    # ---- Fold BatchNorm into one scale/shift per feature (computed once) ---- #
    # Zero-padded batch rows contribute 0 to the sums (b1 was dropped), so we
    # divide by the true batch size (training-mode biased variance).
    inv_b = 1.0 / batch
    mean = jnp.sum(psum[:, 0, :], axis=0, keepdims=True) * inv_b
    ex2 = jnp.sum(psq[:, 0, :], axis=0, keepdims=True) * inv_b
    # NOTE: E[h^2] - E[h]^2 can cancel catastrophically when |mean| >> std; the
    # clamp keeps it non-negative.  Switch to a Welford-style combine of the
    # per-tile partials if activations with very large means are expected.
    var = jnp.maximum(ex2 - mean * mean, 0.0)
    scale = gammap * jax.lax.rsqrt(var + EPS)
    shift = betap - mean * scale

    # ---- Pass 2: folded BN + ReLU + GEMM-2 ----------------------------------- #
    out = pl.pallas_call(
        _bn_relu_gemm2_kernel,
        out_shape=jax.ShapeDtypeStruct((batchp, projp), jnp.float32),
        grid_spec=pltpu.PrefetchScalarGridSpec(
            num_scalar_prefetch=0,
            grid=(nt,),
            in_specs=[pl.BlockSpec((tb, hidp), lambda i: (i, 0)),
                      _pinned_spec((1, hidp)),      # scale
                      _pinned_spec((1, hidp)),      # shift
                      _pinned_spec((hidp, projp)),  # W2
                      _pinned_spec((1, projp))],    # b2
            out_specs=pl.BlockSpec((tb, projp), lambda i: (i, 0))),
        compiler_params=pltpu.CompilerParams(
            dimension_semantics=("parallel",),
            vmem_limit_bytes=vmem_limit),
        cost_estimate=pl.CostEstimate(
            flops=2 * batchp * hidp * projp,
            transcendentals=0,
            bytes_accessed=(batchp * hidp + hidp * projp) * 2
                           + (2 * hidp + projp + batchp * projp) * 4),
    )(h16, scale, shift, w2p, b2p)

    return out[:batch, :proj]


# --------------------------------------------------------------------------- #
# Params / reference / demo
# --------------------------------------------------------------------------- #

def init_params(key, dim, hidden, proj):
    """Deterministic PyTorch-style Linear init (uniform +-1/sqrt(fan_in))."""
    k1, k2, k3, k4 = jax.random.split(key, 4)
    bound1 = 1.0 / (dim ** 0.5)
    bound2 = 1.0 / (hidden ** 0.5)
    w1 = jax.random.uniform(k1, (dim, hidden), jnp.float32, -bound1, bound1)
    b1 = jax.random.uniform(k2, (1, hidden), jnp.float32, -bound1, bound1)
    gamma = jnp.ones((1, hidden), jnp.float32)   # BatchNorm1d affine weight
    beta = jnp.zeros((1, hidden), jnp.float32)   # BatchNorm1d affine bias
    w2 = jax.random.uniform(k3, (hidden, proj), jnp.float32, -bound2, bound2)
    b2 = jax.random.uniform(k4, (1, proj), jnp.float32, -bound2, bound2)
    return w1, b1, gamma, beta, w2, b2


def reference(x, w1, b1, gamma, beta, w2, b2):
    """Reference forward with bf16 matmul operands (matching the kernel's MXU
    dtype) but f32 hidden activations and f32 training-mode BatchNorm math."""
    h = jnp.dot(x.astype(jnp.bfloat16), w1.astype(jnp.bfloat16),
                preferred_element_type=jnp.float32) + b1
    mean = jnp.mean(h, axis=0, keepdims=True)
    var = jnp.mean((h - mean) ** 2, axis=0, keepdims=True)
    hn = (h - mean) * jax.lax.rsqrt(var + EPS) * gamma + beta
    a = jnp.maximum(hn, 0.0).astype(jnp.bfloat16)
    return jnp.dot(a, w2.astype(jnp.bfloat16),
                   preferred_element_type=jnp.float32) + b2


if __name__ == "__main__":
    # Small, deliberately non-128-aligned shapes consistent with
    # MLP(dim, projection_size, hidden_size); tb_max=32 -> 3 batch tiles to
    # exercise the multi-tile grid (production default is 256/512).
    B, DIM, HIDDEN, PROJ = 96, 96, 192, 48

    key = jax.random.PRNGKey(0)
    kx, kp = jax.random.split(key)
    x = jax.random.normal(kx, (B, DIM), jnp.float32)
    raw_params = init_params(kp, DIM, HIDDEN, PROJ)

    prepared = prepare_params(*raw_params)        # one-time pad + bf16 cast
    out = mlp_forward(x, prepared, tb_max=32)
    out = jax.block_until_ready(out)

    ref = reference(x, *raw_params)
    assert out.shape == (B, PROJ)
    # Tolerance covers the bf16 round-trip of the hidden activations h between
    # the two passes (the reference keeps h in f32); matmul operands are bf16
    # in both.  b1 is kept in the reference to validate the exact BN cancellation.
    assert jnp.allclose(out, ref, atol=5e-3, rtol=5e-3), "mismatch vs reference"

    print("KERNEL_OK")
</pallas_src>

<mosaic_0001>
module attributes {stable_mosaic.version = 11 : i64} {
  func.func @_probe_copy_kernel(%arg0: i32, %arg1: memref<8x128xf32, #tpu.memory_space<vmem>>, %arg2: memref<8x128xf32, #tpu.memory_space<vmem>>) attributes {dimension_semantics = [#tpu.dimension_semantics<arbitrary>], iteration_bounds = array<i64: 2>, scalar_prefetch = 0 : i64, scratch_operands = 0 : i64, tpu.core_type = #tpu.core_type<tc>, window_params = [{pipeline_mode = #tpu.pipeline_mode<synchronous>, transform_indices = @transform_0, window_bounds = array<i64: 8, 128>}, {pipeline_mode = #tpu.pipeline_mode<synchronous>, transform_indices = @transform_1, window_bounds = array<i64: 8, 128>}]} {
    %c0 = arith.constant 0 : index
    %c0_0 = arith.constant 0 : index
    %0 = vector.load %arg1[%c0, %c0_0] : memref<8x128xf32, #tpu.memory_space<vmem>>, vector<8x128xf32>
    %c0_1 = arith.constant 0 : index
    %c0_2 = arith.constant 0 : index
    %1 = vector.load %arg2[%c0_1, %c0_2] : memref<8x128xf32, #tpu.memory_space<vmem>>, vector<8x128xf32>
    tpu.vector_store %arg2[%c0_1, %c0_2], %0 {strides = array<i32>} : memref<8x128xf32, #tpu.memory_space<vmem>>, vector<8x128xf32>,
    return
  }
  func.func @transform_0(%arg0: i32) -> (i32, i32) {
    %c0_i32 = arith.constant 0 : i32
    %c0_i32_0 = arith.constant 0 : i32
    %c0_i32_1 = arith.constant 0 : i32
    return %c0_i32, %c0_i32_0 : i32, i32
  }
  func.func @transform_1(%arg0: i32) -> (i32, i32) {
    %c0_i32 = arith.constant 0 : i32
    %c0_i32_0 = arith.constant 0 : i32
    %c0_i32_1 = arith.constant 0 : i32
    return %c0_i32, %c0_i32_0 : i32, i32
  }
}

module attributes {stable_mosaic.version = 11 : i64} {
  func.func @_gemm1_stats_kernel(%arg0: i32, %arg1: memref<32x128xbf16, #tpu.memory_space<vmem>>, %arg2: memref<128x256xbf16, #tpu.memory_space<vmem>>, %arg3: memref<32x256xbf16, #tpu.memory_space<vmem>>, %arg4: memref<1x1x256xf32, #tpu.memory_space<vmem>>, %arg5: memref<1x1x256xf32, #tpu.memory_space<vmem>>) attributes {dimension_semantics = [#tpu.dimension_semantics<parallel>], iteration_bounds = array<i64: 3>, scalar_prefetch = 0 : i64, scratch_operands = 0 : i64, tpu.core_type = #tpu.core_type<tc>, window_params = [{transform_indices = @transform_0, window_bounds = array<i64: 32, 128>}, {pipeline_mode = #tpu.pipeline_mode<synchronous>, transform_indices = @transform_1, window_bounds = array<i64: 128, 256>}, {transform_indices = @transform_2, window_bounds = array<i64: 32, 256>}, {transform_indices = @transform_3, window_bounds = array<i64: 1, 1, 256>}, {transform_indices = @transform_4, window_bounds = array<i64: 1, 1, 256>}]} {
    %c0 = arith.constant 0 : index
    %c0_0 = arith.constant 0 : index
    %0 = vector.load %arg1[%c0, %c0_0] : memref<32x128xbf16, #tpu.memory_space<vmem>>, vector<32x128xbf16>
    %c0_1 = arith.constant 0 : index
    %c0_2 = arith.constant 0 : index
    %1 = vector.load %arg2[%c0_1, %c0_2] : memref<128x256xbf16, #tpu.memory_space<vmem>>, vector<128x256xbf16>
    %cst = arith.constant dense<0.000000e+00> : vector<32x256xf32>
    %2 = tpu.matmul %0, %1, %cst {dimension_numbers = #tpu.dot_dimension_numbers<[1], [0], [0], [1], [0, 0, 1, 1], [], []>} : vector<32x128xbf16>, vector<128x256xbf16>, vector<32x256xf32> -> vector<32x256xf32>
    %3 = arith.truncf %2 : vector<32x256xf32> to vector<32x256xbf16>
    %c0_3 = arith.constant 0 : index
    %c0_4 = arith.constant 0 : index
    %4 = vector.load %arg3[%c0_3, %c0_4] : memref<32x256xbf16, #tpu.memory_space<vmem>>, vector<32x256xbf16>
    tpu.vector_store %arg3[%c0_3, %c0_4], %3 {strides = array<i32>} : memref<32x256xbf16, #tpu.memory_space<vmem>>, vector<32x256xbf16>,
    %5 = arith.extf %3 : vector<32x256xbf16> to vector<32x256xf32>
    %cst_5 = arith.constant dense<0.000000e+00> : vector<256xf32>
    %6 = vector.multi_reduction <add>, %5, %cst_5 [0] : vector<32x256xf32> to vector<256xf32>
    %7 = vector.shape_cast %6 : vector<256xf32> to vector<1x256xf32>
    %8 = vector.shape_cast %7 : vector<1x256xf32> to vector<1x1x256xf32>
    %c0_6 = arith.constant 0 : index
    %c0_7 = arith.constant 0 : index
    %c0_8 = arith.constant 0 : index
    %9 = vector.load %arg4[%c0_6, %c0_7, %c0_8] : memref<1x1x256xf32, #tpu.memory_space<vmem>>, vector<1x1x256xf32>
    tpu.vector_store %arg4[%c0_6, %c0_7, %c0_8], %8 {strides = array<i32>} : memref<1x1x256xf32, #tpu.memory_space<vmem>>, vector<1x1x256xf32>,
    %10 = arith.mulf %5, %5 : vector<32x256xf32>
    %cst_9 = arith.constant dense<0.000000e+00> : vector<256xf32>
    %11 = vector.multi_reduction <add>, %10, %cst_9 [0] : vector<32x256xf32> to vector<256xf32>
    %12 = vector.shape_cast %11 : vector<256xf32> to vector<1x256xf32>
    %13 = vector.shape_cast %12 : vector<1x256xf32> to vector<1x1x256xf32>
    %c0_10 = arith.constant 0 : index
    %c0_11 = arith.constant 0 : index
    %c0_12 = arith.constant 0 : index
    %14 = vector.load %arg5[%c0_10, %c0_11, %c0_12] : memref<1x1x256xf32, #tpu.memory_space<vmem>>, vector<1x1x256xf32>
    tpu.vector_store %arg5[%c0_10, %c0_11, %c0_12], %13 {strides = array<i32>} : memref<1x1x256xf32, #tpu.memory_space<vmem>>, vector<1x1x256xf32>,
    return
  }
  func.func @transform_0(%arg0: i32) -> (i32, i32) {
    %c0_i32 = arith.constant 0 : i32
    %c0_i32_0 = arith.constant 0 : i32
    return %arg0, %c0_i32 : i32, i32
  }
  func.func @transform_1(%arg0: i32) -> (i32, i32) {
    %c0_i32 = arith.constant 0 : i32
    %c0_i32_0 = arith.constant 0 : i32
    %c0_i32_1 = arith.constant 0 : i32
    return %c0_i32, %c0_i32_0 : i32, i32
  }
  func.func @transform_2(%arg0: i32) -> (i32, i32) {
    %c0_i32 = arith.constant 0 : i32
    %c0_i32_0 = arith.constant 0 : i32
    return %arg0, %c0_i32 : i32, i32
  }
  func.func @transform_3(%arg0: i32) -> (i32, i32, i32) {
    %c0_i32 = arith.constant 0 : i32
    %c0_i32_0 = arith.constant 0 : i32
    %c0_i32_1 = arith.constant 0 : i32
    return %arg0, %c0_i32, %c0_i32_0 : i32, i32, i32
  }
  func.func @transform_4(%arg0: i32) -> (i32, i32, i32) {
    %c0_i32 = arith.constant 0 : i32
    %c0_i32_0 = arith.constant 0 : i32
    %c0_i32_1 = arith.constant 0 : i32
    return %arg0, %c0_i32, %c0_i32_0 : i32, i32, i32
  }
}

</mosaic_0001>

<llo_original>
// kernel: tpu_custom_call.1
$region0: #{tpu_custom_call.1}
  #allocation0 [shape = 'u32[]', space=smem, size = 0x4, offset = 0x4, fixed_abs, tag = 'smem constant byte address 0x4 - core index']
  #allocation1 [shape = 'u32[72,128]{1,0:T(1,128)}', space=vmem, size = 0x9000, scoped, tag = 'internal scratch']
  %s0 = inlined_call_operand.hbm [shape: f32[8,128], index: 0, kind: input, shape index: {}]
  %s1 = inlined_call_operand.hbm [shape: f32[8,128], index: 1, kind: output, shape index: {}]
  %s2 = sld [smem:[#allocation0]]
  $region41: #{tpu_custom_call.1} parent=0
    _
  %s4 = ssub.s32 1, %s2
  %s5 = scalar_select 0, %s4, %s2
  $region1: #{tpu_custom_call.1} parent=0
    #allocation2 [shape = 'u8[4096]{0}', space=vmem, size = 0x1000, scoped, tag = 'input window, operand 0, single buffered']
    #allocation3 [shape = 's32[2]{0}', space=sflag, size = 0x8, scoped, tag = 'scoped memory for tpu_custom_call.1']
    #allocation4 [shape = 's32[2]{0}', space=sflag, size = 0x8, scoped, tag = 'scoped memory for tpu_custom_call.1']
    #allocation5 [shape = 'u8[4096]{0}', space=vmem, size = 0x1000, scoped, tag = 'output window, operand 0, single buffered']
    %6 = vsyncpa [#allocation3], 0
    %7 = vsyncpa [#allocation4], 0
    loop: start=0, step=1, limit=4
    $region2: #{tpu_custom_call.1} parent=1 // loop_pre_header
      _
    $region3: #{tpu_custom_call.1} parent=1 // loop_header
      %s9 = sphi 0, %s13
      %p10 = scmp.ge.s32.totalorder %s9, 4
      %s17 = sphi 0, %s17
      %s19 = sphi 0, %s17
      %s20 = sphi 0, %s19
      %s34 = sphi 0, %s20
      %s38 = sphi 0, %s38
      %s40 = sphi 0, %s38
      %s41 = sphi 0, %s40
      %s55 = sphi 0, %s41
    $region4: #{tpu_custom_call.1} parent=1 // loop_header_branch
      %12 = sbr.rel (%p10) target = $region8
    $region5: #{tpu_custom_call.1} parent=1 // loop_body
      %s14 = ssub.s32 %s9, 1
      %s15 = ssub.s32 %s9, 2
      %s16 = sadd.s32 %s9, 1
      %s18 = sadd.s32 %s17, 1
      %p21 = scmp.eq.s32.totalorder %s9, 1
      %p22 = scmp.ne.s32.totalorder %s17, %s19
      %p23 = scmp.eq.s32.totalorder %s9, 0
      %p24 = por %p22, %p23
      %p25 = scmp.ne.s32.totalorder %s17, %s19
      %p26 = scmp.eq.s32.totalorder %s14, 1
      %p27 = por %p25, %p26
      %p28 = scmp.ne.s32.totalorder %s19, %s20
      %p29 = scmp.eq.s32.totalorder %s14, 0
      %p30 = por %p28, %p29
      %p31 = scmp.ne.s32.totalorder %s19, %s20
      %p32 = scmp.eq.s32.totalorder %s15, 1
      %p33 = por %p31, %p32
      %p35 = scmp.ne.s32.totalorder %s20, %s34
      %p36 = scmp.eq.s32.totalorder %s15, 0
      %p37 = por %p35, %p36
      %s39 = sadd.s32 %s38, 1
      %p42 = scmp.eq.s32.totalorder %s9, 1
      %p43 = scmp.ne.s32.totalorder %s38, %s40
      %p44 = scmp.eq.s32.totalorder %s9, 0
      %p45 = por %p43, %p44
      %p46 = scmp.ne.s32.totalorder %s38, %s40
      %p47 = scmp.eq.s32.totalorder %s14, 1
      %p48 = por %p46, %p47
      %p49 = scmp.ne.s32.totalorder %s40, %s41
      %p50 = scmp.eq.s32.totalorder %s14, 0
      %p51 = por %p49, %p50
      %p52 = scmp.ne.s32.totalorder %s40, %s41
      %p53 = scmp.eq.s32.totalorder %s15, 1
      %p54 = por %p52, %p53
      %p56 = scmp.ne.s32.totalorder %s41, %s55
      %p57 = scmp.eq.s32.totalorder %s15, 0
      %p58 = por %p56, %p57
      %p59 = scmp.le.s32.totalorder 1, %s9
      %p60 = scmp.lt.s32.totalorder %s9, 3
      %p61 = pnand %p59, %p60
      %p62 = pneg %p61
      // Predicated region
      $region9: #{tpu_custom_call.1} parent=5 // pred_check
        _
      $region10: #{tpu_custom_call.1} parent=5 // pred_check_branch
        %64 = sbr.rel (%p61) target = $region12
      $region11: #{tpu_custom_call.1} parent=5 // pred_region
        %s65 = ssub.s32 %s9, 1
        // Predicated region
        $region13: #{tpu_custom_call.1} parent=11 // pred_check
          %p66 = pneg %p30
        $region14: #{tpu_custom_call.1} parent=11 // pred_check_branch
          %68 = sbr.rel (%p66) target = $region16
        $region15: #{tpu_custom_call.1} parent=11 // pred_region
          %70 = vsyncadd [#allocation3], 0
          %s72 = sshll.u32 %s0, 4
          %s73 = int_to_ptr.hbm [resolvable:$true] %s72
          %s74 = sshll.u32 [#allocation2], 4
          %s75 = int_to_ptr.vmem [resolvable:$true] %s74
          %77 = dma.hbm_to_vmem [thread:$0]  %s73, 128, %s75, [#allocation3]
        $region16: #{tpu_custom_call.1} parent=11 // pred_fallthru
          _
      $region12: #{tpu_custom_call.1} parent=5 // pred_fallthru
        _
      %p78 = scmp.lt.s32.totalorder %s9, 2
      // Predicated region
      $region17: #{tpu_custom_call.1} parent=5 // pred_check
        %p79 = pneg %p78
      $region18: #{tpu_custom_call.1} parent=5 // pred_check_branch
        %81 = sbr.rel (%p79) target = $region20
      $region19: #{tpu_custom_call.1} parent=5 // pred_region
        _
      $region20: #{tpu_custom_call.1} parent=5 // pred_fallthru
        _
      %p82 = scmp.le.s32.totalorder 1, %s9
      %p83 = scmp.lt.s32.totalorder %s9, 3
      %p84 = pnand %p82, %p83
      %p85 = pneg %p84
      // Predicated region
      $region21: #{tpu_custom_call.1} parent=5 // pred_check
        _
      $region22: #{tpu_custom_call.1} parent=5 // pred_check_branch
        %87 = sbr.rel (%p84) target = $region24
      $region23: #{tpu_custom_call.1} parent=5 // pred_region
        %s88 = ssub.s32 %s9, 1
        // Predicated region
        $region25: #{tpu_custom_call.1} parent=23 // pred_check
          %p89 = pneg %p30
        $region26: #{tpu_custom_call.1} parent=23 // pred_check_branch
          %91 = sbr.rel (%p89) target = $region28
        $region27: #{tpu_custom_call.1} parent=23 // pred_region
          %93 = dma.done [#allocation3], 128
        $region28: #{tpu_custom_call.1} parent=23 // pred_fallthru
          _
        %p94 = pneg %p30
        %p95 = pneg %p27
        %p96 = pneg %p51
        %p97 = pneg %p48
        %v98 = vld [vmem:[#allocation2] sm:$0xff]
        %99 = vst [vmem:[#allocation5] sm:$0xff] %v98
        // Predicated region
        $region29: #{tpu_custom_call.1} parent=23 // pred_check
          %p100 = pneg %p48
        $region30: #{tpu_custom_call.1} parent=23 // pred_check_branch
          %102 = sbr.rel (%p100) target = $region32
        $region31: #{tpu_custom_call.1} parent=23 // pred_region
          %104 = vsyncadd [#allocation4], 0
          %s106 = sshll.u32 [#allocation5], 4
          %s107 = int_to_ptr.vmem [resolvable:$true] %s106
          %s108 = sshll.u32 %s1, 4
          %s109 = int_to_ptr.hbm [resolvable:$true] %s108
          %111 = dma.vmem_to_hbm [thread:$0]  %s107, 128, %s109, [#allocation4]
        $region32: #{tpu_custom_call.1} parent=23 // pred_fallthru
          _
        // Predicated region
        $region33: #{tpu_custom_call.1} parent=23 // pred_check
          %p112 = pneg %p48
        $region34: #{tpu_custom_call.1} parent=23 // pred_check_branch
          %114 = sbr.rel (%p112) target = $region36
        $region35: #{tpu_custom_call.1} parent=23 // pred_region
          %116 = dma.done [#allocation4], 128
        $region36: #{tpu_custom_call.1} parent=23 // pred_fallthru
          _
      $region24: #{tpu_custom_call.1} parent=5 // pred_fallthru
        _
      %p117 = scmp.le.s32.totalorder 2, %s9
      // Predicated region
      $region37: #{tpu_custom_call.1} parent=5 // pred_check
        %p118 = pneg %p117
      $region38: #{tpu_custom_call.1} parent=5 // pred_check_branch
        %120 = sbr.rel (%p118) target = $region40
      $region39: #{tpu_custom_call.1} parent=5 // pred_region
        %s121 = ssub.s32 %s9, 2
      $region40: #{tpu_custom_call.1} parent=5 // pred_fallthru
        _
    $region6: #{tpu_custom_call.1} parent=1 // loop_footer
      %s13 = sadd.s32 1, %s9
    $region7: #{tpu_custom_call.1} parent=1 // loop_footer_branch
      %8 = sbr.rel target = $region3
    $region8: #{tpu_custom_call.1} parent=1 // loop_exit
      _
    %122 = vsyncpa [#allocation3], 1
    %s123 = scalar_lea.sflag [#allocation3], 1
    %124 = vsyncpa %s123, 1
    %125 = vsyncpa [#allocation4], 1
    %s126 = scalar_lea.sflag [#allocation4], 1
    %127 = vsyncpa %s126, 1

// kernel: tpu_custom_call.1
$region0: #{tpu_custom_call.1}
  #allocation0 [shape = 'u32[]', space=smem, size = 0x4, offset = 0x4, fixed_abs, tag = 'smem constant byte address 0x4 - core index']
  #allocation1 [shape = 'u32[72,128]{1,0:T(1,128)}', space=vmem, size = 0x9000, scoped, tag = 'internal scratch']
  %s0 = inlined_call_operand.hbm [shape: bf16[96,128], index: 0, kind: input, shape index: {}]
  %s1 = inlined_call_operand.hbm [shape: bf16[128,256], index: 1, kind: input, shape index: {}]
  %s2 = inlined_call_operand.hbm [shape: bf16[96,256], index: 2, kind: output, shape index: {0}]
  %s3 = inlined_call_operand.hbm [shape: f32[3,1,256], index: 3, kind: output, shape index: {1}]
  %s4 = inlined_call_operand.hbm [shape: f32[3,1,256], index: 4, kind: output, shape index: {2}]
  %5 = xla_tuple %s2, %s3, %s4
  %s6 = sld [smem:[#allocation0]]
  $region65: #{tpu_custom_call.1} parent=0
    _
  %s8 = ssub.s32 1, %s6
  %s9 = scalar_select 0, %s8, %s6
  $region1: #{tpu_custom_call.1} parent=0
    #allocation2 [shape = 'u8[16384]{0}', space=vmem, size = 0x4000, scoped, tag = 'input window, operand 0']
    #allocation3 [shape = 's32[2]{0}', space=sflag, size = 0x8, scoped, tag = 'scoped memory for tpu_custom_call.1']
    #allocation4 [shape = 's32[2]{0}', space=sflag, size = 0x8, scoped, tag = 'scoped memory for tpu_custom_call.1']
    #allocation5 [shape = 'u8[65536]{0}', space=vmem, size = 0x10000, scoped, tag = 'input window, operand 1, single buffered']
    #allocation6 [shape = 's32[1]{0}', space=sflag, size = 0x4, scoped, tag = 'scoped memory for tpu_custom_call.1']
    #allocation7 [shape = 'u8[32768]{0}', space=vmem, size = 0x8000, scoped, tag = 'output window, operand 0']
    #allocation8 [shape = 'u8[2048]{0}', space=vmem, size = 0x800, scoped, tag = 'output window, operand 1']
    #allocation9 [shape = 's32[2]{0}', space=sflag, size = 0x8, scoped, tag = 'scoped memory for tpu_custom_call.1']
    #allocation10 [shape = 'u8[2048]{0}', space=vmem, size = 0x800, scoped, tag = 'output window, operand 2']
    %10 = vsyncpa [#allocation3], 0
    %s11 = scalar_lea.sflag [#allocation3], 1
    %12 = vsyncpa %s11, 0
    %13 = vsyncpa [#allocation6], 0
    %14 = vsyncpa [#allocation4], 0
    %s15 = scalar_lea.sflag [#allocation4], 1
    %16 = vsyncpa %s15, 0
    %17 = vsyncpa [#allocation9], 0
    %s18 = scalar_lea.sflag [#allocation9], 1
    %19 = vsyncpa %s18, 0
    loop: start=0, step=1, limit=5
    $region2: #{tpu_custom_call.1} parent=1 // loop_pre_header
      _
    $region3: #{tpu_custom_call.1} parent=1 // loop_header
      %s21 = sphi 0, %s25
      %p22 = scmp.ge.s32.totalorder %s21, 5
      %s31 = sphi 0, %s33
      %s34 = sphi 0, %s31
      %s35 = sphi 0, %s34
      %s51 = sphi 0, %s35
      %s55 = sphi 0, %s55
      %s57 = sphi 0, %s55
      %s58 = sphi 0, %s57
      %s72 = sphi 0, %s58
      %s78 = sphi 0, %s80
      %s81 = sphi 0, %s78
      %s82 = sphi 0, %s81
      %s98 = sphi 0, %s82
      %s104 = sphi 0, %s106
      %s107 = sphi 0, %s104
      %s108 = sphi 0, %s107
      %s124 = sphi 0, %s108
      %s130 = sphi 0, %s132
      %s133 = sphi 0, %s130
      %s134 = sphi 0, %s133
      %s150 = sphi 0, %s134
    $region4: #{tpu_custom_call.1} parent=1 // loop_header_branch
      %24 = sbr.rel (%p22) target = $region8
    $region5: #{tpu_custom_call.1} parent=1 // loop_body
      %s26 = ssub.s32 %s21, 1
      %s27 = ssub.s32 %s21, 2
      %s28 = sadd.s32 %s21, 1
      %s29 = ssub.s32 %s21, %s28
      %p30 = scmp.eq.s32.totalorder %s29, 0
      %s32 = sadd.s32 %s31, 1
      %s33 = scalar_select %p30, %s31, %s32
      %p36 = pneg %p30
      %p37 = scmp.eq.s32.totalorder %s21, 2
      %p38 = por %p36, %p37
      %p39 = scmp.ne.s32.totalorder %s31, %s34
      %p40 = scmp.eq.s32.totalorder %s21, 0
      %p41 = por %p39, %p40
      %p42 = scmp.ne.s32.totalorder %s31, %s34
      %p43 = scmp.eq.s32.totalorder %s26, 2
      %p44 = por %p42, %p43
      %p45 = scmp.ne.s32.totalorder %s34, %s35
      %p46 = scmp.eq.s32.totalorder %s26, 0
      %p47 = por %p45, %p46
      %p48 = scmp.ne.s32.totalorder %s34, %s35
      %p49 = scmp.eq.s32.totalorder %s27, 2
      %p50 = por %p48, %p49
      %p52 = scmp.ne.s32.totalorder %s35, %s51
      %p53 = scmp.eq.s32.totalorder %s27, 0
      %p54 = por %p52, %p53
      %s56 = sadd.s32 %s55, 1
      %p59 = scmp.eq.s32.totalorder %s21, 2
      %p60 = scmp.ne.s32.totalorder %s55, %s57
      %p61 = scmp.eq.s32.totalorder %s21, 0
      %p62 = por %p60, %p61
      %p63 = scmp.ne.s32.totalorder %s55, %s57
      %p64 = scmp.eq.s32.totalorder %s26, 2
      %p65 = por %p63, %p64
      %p66 = scmp.ne.s32.totalorder %s57, %s58
      %p67 = scmp.eq.s32.totalorder %s26, 0
      %p68 = por %p66, %p67
      %p69 = scmp.ne.s32.totalorder %s57, %s58
      %p70 = scmp.eq.s32.totalorder %s27, 2
      %p71 = por %p69, %p70
      %p73 = scmp.ne.s32.totalorder %s58, %s72
      %p74 = scmp.eq.s32.totalorder %s27, 0
      %p75 = por %p73, %p74
      %s76 = ssub.s32 %s21, %s28
      %p77 = scmp.eq.s32.totalorder %s76, 0
      %s79 = sadd.s32 %s78, 1
      %s80 = scalar_select %p77, %s78, %s79
      %p83 = pneg %p77
      %p84 = scmp.eq.s32.totalorder %s21, 2
      %p85 = por %p83, %p84
      %p86 = scmp.ne.s32.totalorder %s78, %s81
      %p87 = scmp.eq.s32.totalorder %s21, 0
      %p88 = por %p86, %p87
      %p89 = scmp.ne.s32.totalorder %s78, %s81
      %p90 = scmp.eq.s32.totalorder %s26, 2
      %p91 = por %p89, %p90
      %p92 = scmp.ne.s32.totalorder %s81, %s82
      %p93 = scmp.eq.s32.totalorder %s26, 0
      %p94 = por %p92, %p93
      %p95 = scmp.ne.s32.totalorder %s81, %s82
      %p96 = scmp.eq.s32.totalorder %s27, 2
      %p97 = por %p95, %p96
      %p99 = scmp.ne.s32.totalorder %s82, %s98
      %p100 = scmp.eq.s32.totalorder %s27, 0
      %p101 = por %p99, %p100
      %s102 = ssub.s32 %s21, %s28
      %p103 = scmp.eq.s32.totalorder %s102, 0
      %s105 = sadd.s32 %s104, 1
      %s106 = scalar_select %p103, %s104, %s105
      %p109 = pneg %p103
      %p110 = scmp.eq.s32.totalorder %s21, 2
      %p111 = por %p109, %p110
      %p112 = scmp.ne.s32.totalorder %s104, %s107
      %p113 = scmp.eq.s32.totalorder %s21, 0
      %p114 = por %p112, %p113
      %p115 = scmp.ne.s32.totalorder %s104, %s107
      %p116 = scmp.eq.s32.totalorder %s26, 2
      %p117 = por %p115, %p116
      %p118 = scmp.ne.s32.totalorder %s107, %s108
      %p119 = scmp.eq.s32.totalorder %s26, 0
      %p120 = por %p118, %p119
      %p121 = scmp.ne.s32.totalorder %s107, %s108
      %p122 = scmp.eq.s32.totalorder %s27, 2
      %p123 = por %p121, %p122
      %p125 = scmp.ne.s32.totalorder %s108, %s124
      %p126 = scmp.eq.s32.totalorder %s27, 0
      %p127 = por %p125, %p126
      %s128 = ssub.s32 %s21, %s28
      %p129 = scmp.eq.s32.totalorder %s128, 0
      %s131 = sadd.s32 %s130, 1
      %s132 = scalar_select %p129, %s130, %s131
      %p135 = pneg %p129
      %p136 = scmp.eq.s32.totalorder %s21, 2
      %p137 = por %p135, %p136
      %p138 = scmp.ne.s32.totalorder %s130, %s133
      %p139 = scmp.eq.s32.totalorder %s21, 0
      %p140 = por %p138, %p139
      %p141 = scmp.ne.s32.totalorder %s130, %s133
      %p142 = scmp.eq.s32.totalorder %s26, 2
      %p143 = por %p141, %p142
      %p144 = scmp.ne.s32.totalorder %s133, %s134
      %p145 = scmp.eq.s32.totalorder %s26, 0
      %p146 = por %p144, %p145
      %p147 = scmp.ne.s32.totalorder %s133, %s134
      %p148 = scmp.eq.s32.totalorder %s27, 2
      %p149 = por %p147, %p148
      %p151 = scmp.ne.s32.totalorder %s134, %s150
      %p152 = scmp.eq.s32.totalorder %s27, 0
      %p153 = por %p151, %p152
      %p154 = scmp.le.s32.totalorder 1, %s21
      %p155 = scmp.lt.s32.totalorder %s21, 4
      %p156 = pnand %p154, %p155
      %p157 = pneg %p156
      // Predicated region
      $region9: #{tpu_custom_call.1} parent=5 // pred_check
        _
      $region10: #{tpu_custom_call.1} parent=5 // pred_check_branch
        %159 = sbr.rel (%p156) target = $region12
      $region11: #{tpu_custom_call.1} parent=5 // pred_region
        %s160 = ssub.s32 %s21, 1
        // Predicated region
        $region13: #{tpu_custom_call.1} parent=11 // pred_check
          %p161 = pneg %p68
        $region14: #{tpu_custom_call.1} parent=11 // pred_check_branch
          %163 = sbr.rel (%p161) target = $region16
        $region15: #{tpu_custom_call.1} parent=11 // pred_region
          %165 = vsyncadd [#allocation6], 0
          %s166 = sshll.u32 %s1, 4
          %s167 = int_to_ptr.hbm [resolvable:$true] %s166
          %s168 = sshll.u32 [#allocation5], 4
          %s169 = int_to_ptr.vmem [resolvable:$true] %s168
          %174 = dma.hbm_to_vmem [thread:$0]  %s167, 2048, %s169, [#allocation6], 128, 128, 8
        $region16: #{tpu_custom_call.1} parent=11 // pred_fallthru
          _
      $region12: #{tpu_custom_call.1} parent=5 // pred_fallthru
        _
      %p175 = scmp.lt.s32.totalorder %s21, 3
      // Predicated region
      $region17: #{tpu_custom_call.1} parent=5 // pred_check
        %p176 = pneg %p175
      $region18: #{tpu_custom_call.1} parent=5 // pred_check_branch
        %178 = sbr.rel (%p176) target = $region20
      $region19: #{tpu_custom_call.1} parent=5 // pred_region
        // Predicated region
        $region21: #{tpu_custom_call.1} parent=19 // pred_check
          %p179 = pneg %p41
        $region22: #{tpu_custom_call.1} parent=19 // pred_check_branch
          %181 = sbr.rel (%p179) target = $region24
        $region23: #{tpu_custom_call.1} parent=19 // pred_region
          %s182 = sand.u32 %s31, 1
          %s183 = scalar_lea.sflag [#allocation3], %s182
          %s184 = sand.u32 %s31, 1
          %s185 = smul.addr %s184, 16
          %s186 = scalar_lea.vmem [#allocation2], %s185
          %s187 = smul.u32 4, %s21
          %189 = vsyncadd %s183, 0
          %s190 = smul.addr %s187, 4
          %s191 = scalar_lea.hbm %s0, %s190
          %s192 = sshll.u32 %s191, 4
          %s193 = int_to_ptr.hbm [resolvable:$true] %s192
          %s194 = sshll.u32 %s186, 4
          %s195 = int_to_ptr.vmem [resolvable:$true] %s194
          %200 = dma.hbm_to_vmem [thread:$0]  %s193, 256, %s195, %s183, 64, 64, 4
        $region24: #{tpu_custom_call.1} parent=19 // pred_fallthru
          _
      $region20: #{tpu_custom_call.1} parent=5 // pred_fallthru
        _
      %p201 = scmp.le.s32.totalorder 1, %s21
      %p202 = scmp.lt.s32.totalorder %s21, 4
      %p203 = pnand %p201, %p202
      %p204 = pneg %p203
      // Predicated region
      $region25: #{tpu_custom_call.1} parent=5 // pred_check
        _
      $region26: #{tpu_custom_call.1} parent=5 // pred_check_branch
        %206 = sbr.rel (%p203) target = $region28
      $region27: #{tpu_custom_call.1} parent=5 // pred_region
        %s207 = ssub.s32 %s21, 1
        %s208 = sand.u32 %s34, 1
        %s209 = scalar_lea.sflag [#allocation3], %s208
        %s210 = sand.u32 %s34, 1
        %s211 = smul.addr %s210, 16
        %s212 = scalar_lea.vmem [#allocation2], %s211
        // Predicated region
        $region29: #{tpu_custom_call.1} parent=27 // pred_check
          %p213 = pneg %p47
        $region30: #{tpu_custom_call.1} parent=27 // pred_check_branch
          %215 = sbr.rel (%p213) target = $region32
        $region31: #{tpu_custom_call.1} parent=27 // pred_region
          %217 = dma.done %s209, 256
        $region32: #{tpu_custom_call.1} parent=27 // pred_fallthru
          _
        // Predicated region
        $region33: #{tpu_custom_call.1} parent=27 // pred_check
          %p218 = pneg %p68
        $region34: #{tpu_custom_call.1} parent=27 // pred_check_branch
          %220 = sbr.rel (%p218) target = $region36
        $region35: #{tpu_custom_call.1} parent=27 // pred_region
          %222 = dma.done [#allocation6], 2048
        $region36: #{tpu_custom_call.1} parent=27 // pred_fallthru
          _
        %s223 = sand.u32 %s34, 1
        %s224 = scalar_lea.sflag [#allocation3], %s223
        %s225 = sand.u32 %s34, 1
        %s226 = smul.addr %s225, 16
        %s227 = scalar_lea.vmem [#allocation2], %s226
        %p228 = pneg %p47
        %p229 = pneg %p44
        %p230 = pneg %p68
        %p231 = pneg %p65
        %p232 = pneg %p94
        %p233 = pneg %p91
        %s234 = sand.u32 %s81, 1
        %s235 = scalar_lea.sflag [#allocation4], %s234
        %s236 = sand.u32 %s81, 1
        %s237 = smul.addr %s236, 32
        %s238 = scalar_lea.vmem [#allocation7], %s237
        %p239 = pneg %p120
        %p240 = pneg %p117
        %s241 = sand.u32 %s26, 1
        %s242 = scalar_lea.sflag [#allocation9], %s241
        %s243 = sand.u32 %s107, 1
        %s244 = smul.addr %s243, 2
        %s245 = scalar_lea.vmem [#allocation8], %s244
        %p246 = pneg %p146
        %p247 = pneg %p143
        %s248 = sand.u32 %s26, 1
        %s249 = scalar_lea.sflag [#allocation9], %s248
        %s250 = sand.u32 %s133, 1
        %s251 = smul.addr %s250, 2
        %s252 = scalar_lea.vmem [#allocation10], %s251
        %s253 = smul.u32 4, %s26
        %s254 = smul.u32 4, %s26
        %v255 = vld [vmem:[%s212] sm:$0xf]
        %v256 = vld [vmem:[%s212 + $0x4] sm:$0xf]
        %v257 = vld [vmem:[%s212 + $0x8] sm:$0xf]
        %v258 = vld [vmem:[%s212 + $0xc] sm:$0xf]
        %v259 = vld [vmem:[#allocation5] sm:$0xff]
        %v260 = vld [vmem:[#allocation5 + $0x8] sm:$0xff]
        %v261 = vld [vmem:[#allocation5 + $0x10] sm:$0xff]
        %v262 = vld [vmem:[#allocation5 + $0x18] sm:$0xff]
        %v263 = vld [vmem:[#allocation5 + $0x20] sm:$0xff]
        %v264 = vld [vmem:[#allocation5 + $0x28] sm:$0xff]
        %v265 = vld [vmem:[#allocation5 + $0x30] sm:$0xff]
        %v266 = vld [vmem:[#allocation5 + $0x38] sm:$0xff]
        %v267 = vld [vmem:[#allocation5 + $0x40] sm:$0xff]
        %v268 = vld [vmem:[#allocation5 + $0x48] sm:$0xff]
        %v269 = vld [vmem:[#allocation5 + $0x50] sm:$0xff]
        %v270 = vld [vmem:[#allocation5 + $0x58] sm:$0xff]
        %v271 = vld [vmem:[#allocation5 + $0x60] sm:$0xff]
        %v272 = vld [vmem:[#allocation5 + $0x68] sm:$0xff]
        %v273 = vld [vmem:[#allocation5 + $0x70] sm:$0xff]
        %v274 = vld [vmem:[#allocation5 + $0x78] sm:$0xff]
        %v279 = vunpack.c.l.b16 %v255
        %v280 = vunpack.c.l.b16 %v256
        %v281 = vunpack.c.l.b16 %v257
        %v282 = vunpack.c.l.b16 %v258
        %v283 = vpack.c.b16 %v280, %v279
        %v284 = vpack.c.b16 %v282, %v281
        %v303 = vunpack.c.l.b16 %v259
        %v304 = vunpack.c.h.b16 %v259
        %v305 = vunpack.c.l.b16 %v260
        %v306 = vunpack.c.h.b16 %v260
        %v307 = vunpack.c.l.b16 %v261
        %v308 = vunpack.c.h.b16 %v261
        %v309 = vunpack.c.l.b16 %v262
        %v310 = vunpack.c.h.b16 %v262
        %v311 = vunpack.c.l.b16 %v263
        %v312 = vunpack.c.h.b16 %v263
        %v313 = vunpack.c.l.b16 %v264
        %v314 = vunpack.c.h.b16 %v264
        %v315 = vunpack.c.l.b16 %v265
        %v316 = vunpack.c.h.b16 %v265
        %v317 = vunpack.c.l.b16 %v266
        %v318 = vunpack.c.h.b16 %v266
        %v319 = vunpack.c.l.b16 %v267
        %v320 = vunpack.c.h.b16 %v267
        %v321 = vunpack.c.l.b16 %v268
        %v322 = vunpack.c.h.b16 %v268
        %v323 = vunpack.c.l.b16 %v269
        %v324 = vunpack.c.h.b16 %v269
        %v325 = vunpack.c.l.b16 %v270
        %v326 = vunpack.c.h.b16 %v270
        %v327 = vunpack.c.l.b16 %v271
        %v328 = vunpack.c.h.b16 %v271
        %v329 = vunpack.c.l.b16 %v272
        %v330 = vunpack.c.h.b16 %v272
        %v331 = vunpack.c.l.b16 %v273
        %v332 = vunpack.c.h.b16 %v273
        %v333 = vunpack.c.l.b16 %v274
        %v334 = vunpack.c.h.b16 %v274
        %v335 = vpack.c.b16 %v305, %v303
        %v336 = vpack.c.b16 %v306, %v304
        %v337 = vpack.c.b16 %v309, %v307
        %v338 = vpack.c.b16 %v310, %v308
        %v339 = vpack.c.b16 %v313, %v311
        %v340 = vpack.c.b16 %v314, %v312
        %v341 = vpack.c.b16 %v317, %v315
        %v342 = vpack.c.b16 %v318, %v316
        %v343 = vpack.c.b16 %v321, %v319
        %v344 = vpack.c.b16 %v322, %v320
        %v345 = vpack.c.b16 %v325, %v323
        %v346 = vpack.c.b16 %v326, %v324
        %v347 = vpack.c.b16 %v329, %v327
        %v348 = vpack.c.b16 %v330, %v328
        %v349 = vpack.c.b16 %v333, %v331
        %v350 = vpack.c.b16 %v334, %v332
        %367 = vmatpush.bf16.msra.mxu0 %v349
        %368 = vmatpush.bf16.msra.mxu0 %v347
        %369 = vmatpush.bf16.msra.mxu0 %v345
        %370 = vmatpush.bf16.msra.mxu0 %v343
        %371 = vmatpush.bf16.msra.mxu0 %v341
        %372 = vmatpush.bf16.msra.mxu0 %v339
        %373 = vmatpush.bf16.msra.mxu0 %v337
        %374 = vmatpush.bf16.msra.mxu0 %v335
        %375 = vmatmul.bf16.gmra.mxu0 %v283
        %v376 = vpop.f32.mrf.mxu0
        %v377 = vadd.f32 0.0, %v376
        %v378 = vpop.f32.mrf.mxu0
        %v379 = vadd.f32 0.0, %v378
        %380 = vmatmul.bf16.gmra.mxu0 %v284
        %v381 = vpop.f32.mrf.mxu0
        %v382 = vadd.f32 0.0, %v381
        %v383 = vpop.f32.mrf.mxu0
        %v384 = vadd.f32 0.0, %v383
        %385 = vdwg.mxu0
        %386 = vmatpush.bf16.msra.mxu0 %v350
        %387 = vmatpush.bf16.msra.mxu0 %v348
        %388 = vmatpush.bf16.msra.mxu0 %v346
        %389 = vmatpush.bf16.msra.mxu0 %v344
        %390 = vmatpush.bf16.msra.mxu0 %v342
        %391 = vmatpush.bf16.msra.mxu0 %v340
        %392 = vmatpush.bf16.msra.mxu0 %v338
        %393 = vmatpush.bf16.msra.mxu0 %v336
        %394 = vmatmul.bf16.gmra.mxu0 %v283
        %v395 = vpop.f32.mrf.mxu0
        %v396 = vadd.f32 0.0, %v395
        %v397 = vpop.f32.mrf.mxu0
        %v398 = vadd.f32 0.0, %v397
        %399 = vmatmul.bf16.gmra.mxu0 %v284
        %v400 = vpop.f32.mrf.mxu0
        %v401 = vadd.f32 0.0, %v400
        %v402 = vpop.f32.mrf.mxu0
        %v403 = vadd.f32 0.0, %v402
        %404 = vdwg.mxu0
        %v405 = vpack.c.bf16 %v396, %v377
        %v406 = vpack.c.bf16 %v398, %v379
        %v407 = vpack.c.bf16 %v401, %v382
        %v408 = vpack.c.bf16 %v403, %v384
        %409 = vst [vmem:[%s238] sm:$0xff] %v405
        %410 = vst [vmem:[%s238 + $0x8] sm:$0xff] %v406
        %411 = vst [vmem:[%s238 + $0x10] sm:$0xff] %v407
        %412 = vst [vmem:[%s238 + $0x18] sm:$0xff] %v408
        %v413 = vunpack.c.l.bf16 %v405
        %v414 = vunpack.c.h.bf16 %v405
        %v415 = vunpack.c.l.bf16 %v406
        %v416 = vunpack.c.h.bf16 %v406
        %v417 = vunpack.c.l.bf16 %v407
        %v418 = vunpack.c.h.bf16 %v407
        %v419 = vunpack.c.l.bf16 %v408
        %v420 = vunpack.c.h.bf16 %v408
        %v421 = vadd.f32 %v413, %v415
        %v422 = vadd.f32 %v421, %v417
        %v423 = vadd.f32 %v422, %v419
        %v424 = vrot.slane %v423, 4
        %v425 = vadd.f32 %v423, %v424
        %v426 = vrot.slane %v425, 2
        %v427 = vadd.f32 %v425, %v426
        %v428 = vrot.slane %v427, 1
        %v429 = vadd.f32 %v427, %v428
        %v430 = vadd.f32 %v414, %v416
        %v431 = vadd.f32 %v430, %v418
        %v432 = vadd.f32 %v431, %v420
        %v433 = vrot.slane %v432, 4
        %v434 = vadd.f32 %v432, %v433
        %v435 = vrot.slane %v434, 2
        %v436 = vadd.f32 %v434, %v435
        %v437 = vrot.slane %v436, 1
        %v438 = vadd.f32 %v436, %v437
        %v441 = vrot.slane %v438, 7
        %vm442 = vcmask 1040384
        %v443 = vsel %vm442, %v429, %v441
        %v445 = vlaneseq
        %vm446 = vcmp.ge.s32.totalorder %v445, 0
        %vm447 = vcmp.lt.s32.totalorder %v445, 256
        %vm448 = vmand %vm446, %vm447
        %449 = vst.msk [vmem:[%s245] sm:$0x3] %vm448, %v443
        %v450 = vmul.f32 %v413, %v413
        %v451 = vmul.f32 %v414, %v414
        %v452 = vmul.f32 %v415, %v415
        %v453 = vmul.f32 %v416, %v416
        %v454 = vmul.f32 %v417, %v417
        %v455 = vmul.f32 %v418, %v418
        %v456 = vmul.f32 %v419, %v419
        %v457 = vmul.f32 %v420, %v420
        %v458 = vadd.f32 %v450, %v452
        %v459 = vadd.f32 %v458, %v454
        %v460 = vadd.f32 %v459, %v456
        %v461 = vrot.slane %v460, 4
        %v462 = vadd.f32 %v460, %v461
        %v463 = vrot.slane %v462, 2
        %v464 = vadd.f32 %v462, %v463
        %v465 = vrot.slane %v464, 1
        %v466 = vadd.f32 %v464, %v465
        %v467 = vadd.f32 %v451, %v453
        %v468 = vadd.f32 %v467, %v455
        %v469 = vadd.f32 %v468, %v457
        %v470 = vrot.slane %v469, 4
        %v471 = vadd.f32 %v469, %v470
        %v472 = vrot.slane %v471, 2
        %v473 = vadd.f32 %v471, %v472
        %v474 = vrot.slane %v473, 1
        %v475 = vadd.f32 %v473, %v474
        %v478 = vrot.slane %v475, 7
        %v479 = vsel %vm442, %v466, %v478
        %481 = vst.msk [vmem:[%s252] sm:$0x3] %vm448, %v479
        %s482 = sand.u32 %s81, 1
        %s483 = scalar_lea.sflag [#allocation4], %s482
        %s484 = sand.u32 %s81, 1
        %s485 = smul.addr %s484, 32
        %s486 = scalar_lea.vmem [#allocation7], %s485
        %s487 = sand.u32 %s26, 1
        %s488 = scalar_lea.sflag [#allocation9], %s487
        %s489 = sand.u32 %s107, 1
        %s490 = smul.addr %s489, 2
        %s491 = scalar_lea.vmem [#allocation8], %s490
        %s492 = sand.u32 %s26, 1
        %s493 = scalar_lea.sflag [#allocation9], %s492
        %s494 = sand.u32 %s133, 1
        %s495 = smul.addr %s494, 2
        %s496 = scalar_lea.vmem [#allocation10], %s495
        // Predicated region
        $region37: #{tpu_custom_call.1} parent=27 // pred_check
          %p497 = pneg %p91
        $region38: #{tpu_custom_call.1} parent=27 // pred_check_branch
          %499 = sbr.rel (%p497) target = $region40
        $region39: #{tpu_custom_call.1} parent=27 // pred_region
          %s500 = smul.u32 4, %s26
          %502 = vsyncadd %s483, 0
          %s503 = smul.addr %s500, 2
          %s504 = smul.addr %s503, 4
          %s505 = scalar_lea.hbm %s2, %s504
          %s506 = sshll.u32 %s486, 4
          %s507 = int_to_ptr.vmem [resolvable:$true] %s506
          %s508 = sshll.u32 %s505, 4
          %s509 = int_to_ptr.hbm [resolvable:$true] %s508
          %514 = dma.vmem_to_hbm [thread:$0]  %s507, 512, %s509, %s483, 128, 128, 8
        $region40: #{tpu_custom_call.1} parent=27 // pred_fallthru
          _
        // Predicated region
        $region41: #{tpu_custom_call.1} parent=27 // pred_check
          %p515 = pneg %p117
        $region42: #{tpu_custom_call.1} parent=27 // pred_check_branch
          %517 = sbr.rel (%p515) target = $region44
        $region43: #{tpu_custom_call.1} parent=27 // pred_region
          %519 = vsyncadd %s488, 0
          %s520 = smul.addr %s26, 2
          %s521 = scalar_lea.hbm %s3, %s520
          %s523 = sshll.u32 %s491, 4
          %s524 = int_to_ptr.vmem [resolvable:$true] %s523
          %s525 = sshll.u32 %s521, 4
          %s526 = int_to_ptr.hbm [resolvable:$true] %s525
          %528 = dma.vmem_to_hbm [thread:$0]  %s524, 32, %s526, %s488
        $region44: #{tpu_custom_call.1} parent=27 // pred_fallthru
          _
        // Predicated region
        $region45: #{tpu_custom_call.1} parent=27 // pred_check
          %p529 = pneg %p143
        $region46: #{tpu_custom_call.1} parent=27 // pred_check_branch
          %531 = sbr.rel (%p529) target = $region48
        $region47: #{tpu_custom_call.1} parent=27 // pred_region
          %533 = vsyncadd %s493, 0
          %s534 = smul.addr %s26, 2
          %s535 = scalar_lea.hbm %s4, %s534
          %s537 = sshll.u32 %s496, 4
          %s538 = int_to_ptr.vmem [resolvable:$true] %s537
          %s539 = sshll.u32 %s535, 4
          %s540 = int_to_ptr.hbm [resolvable:$true] %s539
          %542 = dma.vmem_to_hbm [thread:$0]  %s538, 32, %s540, %s493
        $region48: #{tpu_custom_call.1} parent=27 // pred_fallthru
          _
      $region28: #{tpu_custom_call.1} parent=5 // pred_fallthru
        _
      %p543 = scmp.le.s32.totalorder 2, %s21
      // Predicated region
      $region49: #{tpu_custom_call.1} parent=5 // pred_check
        %p544 = pneg %p543
      $region50: #{tpu_custom_call.1} parent=5 // pred_check_branch
        %546 = sbr.rel (%p544) target = $region52
      $region51: #{tpu_custom_call.1} parent=5 // pred_region
        %s547 = ssub.s32 %s21, 2
        // Predicated region
        $region53: #{tpu_custom_call.1} parent=51 // pred_check
          %p548 = pneg %p97
        $region54: #{tpu_custom_call.1} parent=51 // pred_check_branch
          %550 = sbr.rel (%p548) target = $region56
        $region55: #{tpu_custom_call.1} parent=51 // pred_region
          %s551 = sand.u32 %s82, 1
          %s552 = scalar_lea.sflag [#allocation4], %s551
          %s553 = sand.u32 %s82, 1
          %s554 = smul.addr %s553, 32
          %s555 = scalar_lea.vmem [#allocation7], %s554
          %557 = dma.done %s552, 512
        $region56: #{tpu_custom_call.1} parent=51 // pred_fallthru
          _
        // Predicated region
        $region57: #{tpu_custom_call.1} parent=51 // pred_check
          %p558 = pneg %p123
        $region58: #{tpu_custom_call.1} parent=51 // pred_check_branch
          %560 = sbr.rel (%p558) target = $region60
        $region59: #{tpu_custom_call.1} parent=51 // pred_region
          %s561 = sand.u32 %s27, 1
          %s562 = scalar_lea.sflag [#allocation9], %s561
          %s563 = sand.u32 %s108, 1
          %s564 = smul.addr %s563, 2
          %s565 = scalar_lea.vmem [#allocation8], %s564
          %567 = dma.done %s562, 32
        $region60: #{tpu_custom_call.1} parent=51 // pred_fallthru
          _
        // Predicated region
        $region61: #{tpu_custom_call.1} parent=51 // pred_check
          %p568 = pneg %p149
        $region62: #{tpu_custom_call.1} parent=51 // pred_check_branch
          %570 = sbr.rel (%p568) target = $region64
        $region63: #{tpu_custom_call.1} parent=51 // pred_region
          %s571 = sand.u32 %s27, 1
          %s572 = scalar_lea.sflag [#allocation9], %s571
          %s573 = sand.u32 %s134, 1
          %s574 = smul.addr %s573, 2
          %s575 = scalar_lea.vmem [#allocation10], %s574
          %577 = dma.done %s572, 32
        $region64: #{tpu_custom_call.1} parent=51 // pred_fallthru
          _
      $region52: #{tpu_custom_call.1} parent=5 // pred_fallthru
        _
    $region6: #{tpu_custom_call.1} parent=1 // loop_footer
      %s25 = sadd.s32 1, %s21
    $region7: #{tpu_custom_call.1} parent=1 // loop_footer_branch
      %20 = sbr.rel target = $region3
    $region8: #{tpu_custom_call.1} parent=1 // loop_exit
      _
    %578 = vsyncpa [#allocation3], 1
    %s579 = scalar_lea.sflag [#allocation3], 1
    %580 = vsyncpa %s579, 1
    %581 = vsyncpa [#allocation6], 1
    %582 = vsyncpa [#allocation4], 1
    %s583 = scalar_lea.sflag [#allocation4], 1
    %584 = vsyncpa %s583, 1
    %585 = vsyncpa [#allocation9], 1
    %s586 = scalar_lea.sflag [#allocation9], 1
    %587 = vsyncpa %s586, 1

</llo_original>
